<compile_context>
chip_gen: v7x
topology: tpu7x:2x2x1
jax: 0.10.0
libtpu: 0.0.40
codegen_flags: <defaults>
</compile_context>

<pallas_src>
import functools
import math

import jax
import jax.numpy as jnp
from jax.experimental import pallas as pl
from jax.experimental.pallas import tpu as pltpu


def _round_up(x: int, m: int) -> int:
    return ((x + m - 1) // m) * m


# ----------------------------------------------------------------------------
# Linear (matmul + bias [+ GELU] [+ residual]) kernel -- MXU
# ----------------------------------------------------------------------------
def _linear_kernel(*refs, activation, has_residual):
    if has_residual:
        x_ref, w_ref, b_ref, r_ref, o_ref = refs
    else:
        x_ref, w_ref, b_ref, o_ref = refs
        r_ref = None
    acc = jnp.dot(
        x_ref[...].astype(jnp.bfloat16),
        w_ref[...].astype(jnp.bfloat16),
        preferred_element_type=jnp.float32,
    )
    acc = acc + b_ref[...].astype(jnp.float32)
    if activation == "gelu":
        # tanh-approximation GELU (matches the GPT-from-scratch GELU module)
        c = math.sqrt(2.0 / math.pi)
        acc = 0.5 * acc * (1.0 + jnp.tanh(c * (acc + 0.044715 * acc * acc * acc)))
    if r_ref is not None:
        acc = acc + r_ref[...].astype(jnp.float32)
    o_ref[...] = acc.astype(o_ref.dtype)


def linear(x, w, b, activation=None, residual=None, out_dtype=jnp.float32):
    """x: [M, K], w: [K, N] (bf16), b: [N] -> [M, N] (x @ w + b [+gelu] [+residual])."""
    M, K = x.shape
    N = w.shape[1]

    # Tile both M and N; keep K whole (fits VMEM for GPT-sized K <= 4*D).
    tm = min(_round_up(M, 8), 256)
    tn = min(_round_up(N, 128), 512)
    Mp = _round_up(M, tm)
    Np = _round_up(N, tn)

    if Mp != M:
        x = jnp.pad(x, ((0, Mp - M), (0, 0)))
    wp = jnp.pad(w, ((0, 0), (0, Np - N))) if Np != N else w
    bp = jnp.pad(b, ((0, Np - N),)) if Np != N else b
    rp = residual
    if residual is not None and (Mp != M or Np != N):
        rp = jnp.pad(residual, ((0, Mp - M), (0, Np - N)))

    in_specs = [
        pl.BlockSpec((tm, K), lambda i, j: (i, 0)),
        pl.BlockSpec((K, tn), lambda i, j: (0, j)),
        pl.BlockSpec((1, tn), lambda i, j: (0, j)),
    ]
    args = [x, wp, bp.reshape(1, Np)]
    if residual is not None:
        in_specs.append(pl.BlockSpec((tm, tn), lambda i, j: (i, j)))
        args.append(rp)

    bytes_accessed = int(
        Mp * K * x.dtype.itemsize
        + K * Np * wp.dtype.itemsize
        + Np * 4
        + Mp * Np * jnp.dtype(out_dtype).itemsize
        + (Mp * Np * rp.dtype.itemsize if residual is not None else 0)
    )

    out = pl.pallas_call(
        functools.partial(_linear_kernel, activation=activation,
                          has_residual=residual is not None),
        out_shape=jax.ShapeDtypeStruct((Mp, Np), out_dtype),
        grid_spec=pltpu.PrefetchScalarGridSpec(
            num_scalar_prefetch=0,
            grid=(Mp // tm, Np // tn),
            in_specs=in_specs,
            out_specs=pl.BlockSpec((tm, tn), lambda i, j: (i, j)),
        ),
        compiler_params=pltpu.CompilerParams(
            dimension_semantics=("parallel", "parallel"),
            vmem_limit_bytes=64 * 1024 * 1024),
        cost_estimate=pl.CostEstimate(
            flops=2 * Mp * K * Np,
            transcendentals=(Mp * Np if activation == "gelu" else 0),
            bytes_accessed=bytes_accessed),
    )(*args)

    if Mp != M or Np != N:
        out = out[:M, :N]
    return out


# ----------------------------------------------------------------------------
# LayerNorm kernel -- VPU
# ----------------------------------------------------------------------------
def _layernorm_kernel(x_ref, g_ref, b_ref, o_ref):
    x = x_ref[...].astype(jnp.float32)
    mean = jnp.mean(x, axis=-1, keepdims=True)
    var = jnp.mean((x - mean) ** 2, axis=-1, keepdims=True)      # biased variance
    norm = (x - mean) * jax.lax.rsqrt(var + 1e-5)
    o_ref[...] = (norm * g_ref[...].astype(jnp.float32)
                  + b_ref[...].astype(jnp.float32)).astype(o_ref.dtype)


def layernorm(x, gamma, beta):
    """x: [M, D] -> [M, D] (f32)."""
    M, D = x.shape
    tm = min(_round_up(M, 8), 256)
    Mp = _round_up(M, tm)
    xp = jnp.pad(x, ((0, Mp - M), (0, 0))) if Mp != M else x
    out = pl.pallas_call(
        _layernorm_kernel,
        out_shape=jax.ShapeDtypeStruct((Mp, D), jnp.float32),
        grid_spec=pltpu.PrefetchScalarGridSpec(
            num_scalar_prefetch=0,
            grid=(Mp // tm,),
            in_specs=[
                pl.BlockSpec((tm, D), lambda i: (i, 0)),
                pl.BlockSpec((1, D), lambda i: (0, 0)),
                pl.BlockSpec((1, D), lambda i: (0, 0)),
            ],
            out_specs=pl.BlockSpec((tm, D), lambda i: (i, 0)),
        ),
        compiler_params=pltpu.CompilerParams(
            dimension_semantics=("parallel",),
            vmem_limit_bytes=64 * 1024 * 1024),
    )(xp, gamma.reshape(1, D), beta.reshape(1, D))
    return out[:M] if Mp != M else out


# ----------------------------------------------------------------------------
# Causal multi-head attention kernel -- takes fused qkv [B, T, 3D], no transposes
# ----------------------------------------------------------------------------
def _attention_kernel(qkv_ref, o_ref, *, n_heads, scale):
    _, T, D3 = qkv_ref.shape
    D = D3 // 3
    hd = D // n_heads
    qkv = qkv_ref[0]                                                # [T, 3D]
    row = jax.lax.broadcasted_iota(jnp.int32, (T, T), 0)
    col = jax.lax.broadcasted_iota(jnp.int32, (T, T), 1)
    causal = col <= row
    outs = []
    # TODO(synk): for very long contexts, switch to a flash-style K-tiled
    # online-softmax loop instead of materializing the full [T, T] scores.
    for h in range(n_heads):
        q = qkv[:, h * hd:(h + 1) * hd].astype(jnp.float32) * scale   # fold scale into q
        k = qkv[:, D + h * hd:D + (h + 1) * hd]
        v = qkv[:, 2 * D + h * hd:2 * D + (h + 1) * hd]
        s = jnp.dot(q.astype(jnp.bfloat16), k.astype(jnp.bfloat16).T,
                    preferred_element_type=jnp.float32)               # [T, T]
        s = jnp.where(causal, s, -1e30)                               # causal mask
        s = s - jnp.max(s, axis=-1, keepdims=True)
        p = jnp.exp(s)
        p = p * pl.reciprocal(jnp.sum(p, axis=-1, keepdims=True), approx=True)
        outs.append(jnp.dot(p.astype(jnp.bfloat16), v.astype(jnp.bfloat16),
                            preferred_element_type=jnp.float32))
    # Single lane-dense [T, D] store for all heads.
    o_ref[0] = jnp.concatenate(outs, axis=-1).astype(o_ref.dtype)


def causal_attention(qkv, n_heads):
    """qkv: [B, T, 3D] -> [B, T, D] (same dtype as qkv)."""
    B, T, D3 = qkv.shape
    D = D3 // 3
    hd = D // n_heads
    scale = 1.0 / math.sqrt(hd)
    bytes_accessed = int(B * T * D3 * qkv.dtype.itemsize + B * T * D * qkv.dtype.itemsize)
    return pl.pallas_call(
        functools.partial(_attention_kernel, n_heads=n_heads, scale=scale),
        out_shape=jax.ShapeDtypeStruct((B, T, D), qkv.dtype),
        grid_spec=pltpu.PrefetchScalarGridSpec(
            num_scalar_prefetch=0,
            grid=(B,),
            in_specs=[pl.BlockSpec((1, T, D3), lambda b: (b, 0, 0))],
            out_specs=pl.BlockSpec((1, T, D), lambda b: (b, 0, 0)),
        ),
        compiler_params=pltpu.CompilerParams(
            dimension_semantics=("parallel",),
            vmem_limit_bytes=64 * 1024 * 1024),
        cost_estimate=pl.CostEstimate(
            flops=4 * B * n_heads * T * T * hd,
            transcendentals=B * n_heads * T * T,
            bytes_accessed=bytes_accessed),
    )(qkv)


# ----------------------------------------------------------------------------
# Model composition (glue in plain JAX, compute in Pallas kernels above)
# ----------------------------------------------------------------------------
def gpt_forward(tokens, params, n_heads):
    B, T = tokens.shape
    D = params["wte"].shape[1]

    # Embedding lookups (gather) stay in JAX glue.
    x = params["wte"][tokens] + params["wpe"][:T][None, :, :]        # [B, T, D]
    x2d = x.reshape(B * T, D).astype(jnp.float32)

    for layer in params["layers"]:
        # --- attention sub-block (pre-norm); residual fused into proj linear ---
        h = layernorm(x2d, layer["ln1_g"], layer["ln1_b"])
        qkv = linear(h, layer["w_qkv"], layer["b_qkv"], out_dtype=jnp.bfloat16)
        attn = causal_attention(qkv.reshape(B, T, 3 * D), n_heads)   # [B, T, D] bf16
        x2d = linear(attn.reshape(B * T, D), layer["w_proj"], layer["b_proj"],
                     residual=x2d)

        # --- feed-forward sub-block (pre-norm); residual fused into ff2 linear --
        h = layernorm(x2d, layer["ln2_g"], layer["ln2_b"])
        h = linear(h, layer["w_ff1"], layer["b_ff1"], activation="gelu",
                   out_dtype=jnp.bfloat16)
        x2d = linear(h, layer["w_ff2"], layer["b_ff2"], residual=x2d)

    # final LayerNorm + LM head
    h = layernorm(x2d, params["lnf_g"], params["lnf_b"])
    logits = linear(h, params["w_head"], params["b_head"])           # [B*T, V] f32
    return logits.reshape(B, T, -1)


def init_params(key, vocab_size, context_length, embed_dim, n_layers):
    def nrm(k, shape, std=0.02, dtype=jnp.float32):
        return (std * jax.random.normal(k, shape)).astype(dtype)

    # exactly 4 top-level + 9 per-layer random tensors
    keys = jax.random.split(key, 4 + 9 * n_layers)
    it = iter(keys)
    params = {
        "wte": nrm(next(it), (vocab_size, embed_dim)),
        "wpe": nrm(next(it), (context_length, embed_dim)),
        "lnf_g": jnp.ones((embed_dim,), jnp.float32),
        "lnf_b": jnp.zeros((embed_dim,), jnp.float32),
        "w_head": nrm(next(it), (embed_dim, vocab_size), dtype=jnp.bfloat16),
        "b_head": nrm(next(it), (vocab_size,)),
        "layers": [],
    }
    hidden = 4 * embed_dim
    for _ in range(n_layers):
        wq = nrm(next(it), (embed_dim, embed_dim))
        wk = nrm(next(it), (embed_dim, embed_dim))
        wv = nrm(next(it), (embed_dim, embed_dim))
        layer = {
            "ln1_g": jnp.ones((embed_dim,), jnp.float32),
            "ln1_b": jnp.zeros((embed_dim,), jnp.float32),
            "w_qkv": jnp.concatenate([wq, wk, wv], axis=1).astype(jnp.bfloat16),
            "b_qkv": jnp.zeros((3 * embed_dim,), jnp.float32),       # qkv_bias=False
            "w_proj": nrm(next(it), (embed_dim, embed_dim), dtype=jnp.bfloat16),
            "b_proj": nrm(next(it), (embed_dim,)),
            "ln2_g": jnp.ones((embed_dim,), jnp.float32),
            "ln2_b": jnp.zeros((embed_dim,), jnp.float32),
            "w_ff1": nrm(next(it), (embed_dim, hidden), dtype=jnp.bfloat16),
            "b_ff1": nrm(next(it), (hidden,)),
            "w_ff2": nrm(next(it), (hidden, embed_dim), dtype=jnp.bfloat16),
            "b_ff2": nrm(next(it), (embed_dim,)),
        }
        params["layers"].append(layer)
    return params


if __name__ == "__main__":
    # Small test shapes consistent with the module:
    #   batch=2, context_length=8, embed_dim=32, n_heads=4, 2 transformer layers,
    #   vocab_size=512 (small stand-in for the 50257 default).
    B, T = 2, 8
    EMBED_DIM, N_HEADS, N_LAYERS, VOCAB = 32, 4, 2, 512

    key = jax.random.PRNGKey(0)
    pkey, tkey = jax.random.split(key)
    params = init_params(pkey, VOCAB, T, EMBED_DIM, N_LAYERS)
    tokens = jax.random.randint(tkey, (B, T), 0, VOCAB, dtype=jnp.int32)

    # TODO(synk): dropout from the reference Transformer blocks is omitted
    # (inference semantics, rate not exposed in Model.__init__).
    logits = gpt_forward(tokens, params, N_HEADS)
    logits = jax.block_until_ready(logits)
    assert logits.shape == (B, T, VOCAB) and logits.dtype == jnp.float32
    assert bool(jnp.all(jnp.isfinite(logits)))
    print("KERNEL_OK")
</pallas_src>

<mosaic_0001>
module attributes {stable_mosaic.version = 11 : i64} {
  func.func @_layernorm_kernel(%arg0: i32, %arg1: memref<16x32xf32, #tpu.memory_space<vmem>>, %arg2: memref<1x32xf32, #tpu.memory_space<vmem>>, %arg3: memref<1x32xf32, #tpu.memory_space<vmem>>, %arg4: memref<16x32xf32, #tpu.memory_space<vmem>>) attributes {dimension_semantics = [#tpu.dimension_semantics<parallel>], iteration_bounds = array<i64: 1>, scalar_prefetch = 0 : i64, scratch_operands = 0 : i64, tpu.core_type = #tpu.core_type<tc>, window_params = [{transform_indices = @transform_0, window_bounds = array<i64: 16, 32>}, {pipeline_mode = #tpu.pipeline_mode<synchronous>, transform_indices = @transform_1, window_bounds = array<i64: 1, 32>}, {pipeline_mode = #tpu.pipeline_mode<synchronous>, transform_indices = @transform_2, window_bounds = array<i64: 1, 32>}, {transform_indices = @transform_3, window_bounds = array<i64: 16, 32>}]} {
    %c0 = arith.constant 0 : index
    %c0_0 = arith.constant 0 : index
    %0 = vector.load %arg1[%c0, %c0_0] : memref<16x32xf32, #tpu.memory_space<vmem>>, vector<16x32xf32>
    %cst = arith.constant dense<0.000000e+00> : vector<16xf32>
    %1 = vector.multi_reduction <add>, %0, %cst [1] : vector<16x32xf32> to vector<16xf32>
    %2 = vector.shape_cast %1 : vector<16xf32> to vector<16x1xf32>
    %cst_1 = arith.constant 3.200000e+01 : f32
    %3 = vector.broadcast %cst_1 : f32 to vector<16x1xf32>
    %4 = arith.divf %2, %3 : vector<16x1xf32>
    %5 = vector.broadcast %4 : vector<16x1xf32> to vector<16x32xf32>
    %6 = arith.subf %0, %5 : vector<16x32xf32>
    %7 = arith.mulf %6, %6 : vector<16x32xf32>
    %cst_2 = arith.constant dense<0.000000e+00> : vector<16xf32>
    %8 = vector.multi_reduction <add>, %7, %cst_2 [1] : vector<16x32xf32> to vector<16xf32>
    %9 = vector.shape_cast %8 : vector<16xf32> to vector<16x1xf32>
    %cst_3 = arith.constant 3.200000e+01 : f32
    %10 = vector.broadcast %cst_3 : f32 to vector<16x1xf32>
    %11 = arith.divf %9, %10 : vector<16x1xf32>
    %12 = vector.broadcast %4 : vector<16x1xf32> to vector<16x32xf32>
    %13 = arith.subf %0, %12 : vector<16x32xf32>
    %cst_4 = arith.constant 9.99999974E-6 : f32
    %14 = vector.broadcast %cst_4 : f32 to vector<16x1xf32>
    %15 = arith.addf %11, %14 : vector<16x1xf32>
    %16 = math.rsqrt %15 : vector<16x1xf32>
    %17 = vector.broadcast %16 : vector<16x1xf32> to vector<16x32xf32>
    %18 = arith.mulf %13, %17 : vector<16x32xf32>
    %c0_5 = arith.constant 0 : index
    %c0_6 = arith.constant 0 : index
    %19 = vector.load %arg2[%c0_5, %c0_6] : memref<1x32xf32, #tpu.memory_space<vmem>>, vector<1x32xf32>
    %20 = vector.broadcast %19 : vector<1x32xf32> to vector<16x32xf32>
    %21 = arith.mulf %18, %20 : vector<16x32xf32>
    %c0_7 = arith.constant 0 : index
    %c0_8 = arith.constant 0 : index
    %22 = vector.load %arg3[%c0_7, %c0_8] : memref<1x32xf32, #tpu.memory_space<vmem>>, vector<1x32xf32>
    %23 = vector.broadcast %22 : vector<1x32xf32> to vector<16x32xf32>
    %24 = arith.addf %21, %23 : vector<16x32xf32>
    %c0_9 = arith.constant 0 : index
    %c0_10 = arith.constant 0 : index
    %25 = vector.load %arg4[%c0_9, %c0_10] : memref<16x32xf32, #tpu.memory_space<vmem>>, vector<16x32xf32>
    tpu.vector_store %arg4[%c0_9, %c0_10], %24 {strides = array<i32>} : memref<16x32xf32, #tpu.memory_space<vmem>>, vector<16x32xf32>,
    return
  }
  func.func @transform_0(%arg0: i32) -> (i32, i32) {
    %c0_i32 = arith.constant 0 : i32
    %c0_i32_0 = arith.constant 0 : i32
    return %arg0, %c0_i32 : i32, i32
  }
  func.func @transform_1(%arg0: i32) -> (i32, i32) {
    %c0_i32 = arith.constant 0 : i32
    %c0_i32_0 = arith.constant 0 : i32
    %c0_i32_1 = arith.constant 0 : i32
    return %c0_i32, %c0_i32_0 : i32, i32
  }
  func.func @transform_2(%arg0: i32) -> (i32, i32) {
    %c0_i32 = arith.constant 0 : i32
    %c0_i32_0 = arith.constant 0 : i32
    %c0_i32_1 = arith.constant 0 : i32
    return %c0_i32, %c0_i32_0 : i32, i32
  }
  func.func @transform_3(%arg0: i32) -> (i32, i32) {
    %c0_i32 = arith.constant 0 : i32
    %c0_i32_0 = arith.constant 0 : i32
    return %arg0, %c0_i32 : i32, i32
  }
}

</mosaic_0001>

<llo_original>
// kernel: tpu_custom_call.1
$region0: #{tpu_custom_call.1}
  #allocation0 [shape = 'u32[]', space=smem, size = 0x4, offset = 0x4, fixed_abs, tag = 'smem constant byte address 0x4 - core index']
  #allocation1 [shape = 'u32[144,128]{1,0:T(1,128)}', space=vmem, size = 0x12000, scoped, tag = 'internal scratch']
  %s0 = inlined_call_operand.hbm [shape: f32[16,32], index: 0, kind: input, shape index: {}]
  %s1 = inlined_call_operand.hbm [shape: f32[1,32], index: 1, kind: input, shape index: {}]
  %s2 = inlined_call_operand.hbm [shape: f32[1,32], index: 2, kind: input, shape index: {}]
  %s3 = inlined_call_operand.hbm [shape: f32[16,32], index: 3, kind: output, shape index: {}]
  %s4 = sld [smem:[#allocation0]]
  $region34: #{tpu_custom_call.1} parent=0
    _
  %s6 = ssub.s32 1, %s4
  %s7 = scalar_select 0, %s6, %s4
  $region1: #{tpu_custom_call.1} parent=0
    #allocation2 [shape = 'u8[8192]{0}', space=vmem, size = 0x2000, scoped, tag = 'input window, operand 0, single buffered']
    #allocation3 [shape = 's32[1]{0}', space=sflag, size = 0x4, scoped, tag = 'scoped memory for tpu_custom_call.1']
    #allocation4 [shape = 's32[1]{0}', space=sflag, size = 0x4, scoped, tag = 'scoped memory for tpu_custom_call.1']
    #allocation5 [shape = 'u8[512]{0}', space=vmem, size = 0x400, scoped, tag = 'input window, operand 1, single buffered']
    #allocation6 [shape = 's32[1]{0}', space=sflag, size = 0x4, scoped, tag = 'scoped memory for tpu_custom_call.1']
    #allocation7 [shape = 'u8[512]{0}', space=vmem, size = 0x400, scoped, tag = 'input window, operand 2, single buffered']
    #allocation8 [shape = 'u8[8192]{0}', space=vmem, size = 0x2000, scoped, tag = 'output window, operand 0, single buffered']
    %8 = vsyncpa [#allocation3], 0
    %9 = vsyncpa [#allocation6], 0
    %10 = vsyncpa [#allocation4], 0
    // Predicated region
    $region2: #{tpu_custom_call.1} parent=1 // pred_check
      _
    $region3: #{tpu_custom_call.1} parent=1 // pred_check_branch
      %12 = sbr.rel (0) target = $region5
    $region4: #{tpu_custom_call.1} parent=1 // pred_region
      %s14 = ssub.s32 256, 256
      %15 = vsyncadd [#allocation3], %s14
      %s16 = sshll.u32 [#allocation2], 4
      %s17 = int_to_ptr.vmem [resolvable:$true] %s16
      %22 = dma.hbm_to_vmem [thread:$0]  %s0, 256, %s17, [#allocation3], 128, 128, 8
    $region5: #{tpu_custom_call.1} parent=1 // pred_fallthru
      _
    // Predicated region
    $region6: #{tpu_custom_call.1} parent=1 // pred_check
      _
    $region7: #{tpu_custom_call.1} parent=1 // pred_check_branch
      %24 = sbr.rel (0) target = $region9
    $region8: #{tpu_custom_call.1} parent=1 // pred_region
      %s26 = ssub.s32 16, 16
      %27 = vsyncadd [#allocation6], %s26
      %s29 = sshll.u32 [#allocation5], 4
      %s30 = int_to_ptr.vmem [resolvable:$true] %s29
      %32 = dma.hbm_to_vmem [thread:$0]  %s1, 16, %s30, [#allocation6]
    $region9: #{tpu_custom_call.1} parent=1 // pred_fallthru
      _
    // Predicated region
    $region10: #{tpu_custom_call.1} parent=1 // pred_check
      _
    $region11: #{tpu_custom_call.1} parent=1 // pred_check_branch
      %34 = sbr.rel (0) target = $region13
    $region12: #{tpu_custom_call.1} parent=1 // pred_region
      %s36 = ssub.s32 16, 16
      %37 = vsyncadd [#allocation6], %s36
      %s39 = sshll.u32 [#allocation7], 4
      %s40 = int_to_ptr.vmem [resolvable:$true] %s39
      %42 = dma.hbm_to_vmem [thread:$0]  %s2, 16, %s40, [#allocation6]
    $region13: #{tpu_custom_call.1} parent=1 // pred_fallthru
      _
    // Predicated region
    $region14: #{tpu_custom_call.1} parent=1 // pred_check
      _
    $region15: #{tpu_custom_call.1} parent=1 // pred_check_branch
      %44 = sbr.rel (0) target = $region17
    $region16: #{tpu_custom_call.1} parent=1 // pred_region
      %45 = dma.done [#allocation3], 256
    $region17: #{tpu_custom_call.1} parent=1 // pred_fallthru
      _
    // Predicated region
    $region18: #{tpu_custom_call.1} parent=1 // pred_check
      _
    $region19: #{tpu_custom_call.1} parent=1 // pred_check_branch
      %47 = sbr.rel (0) target = $region21
    $region20: #{tpu_custom_call.1} parent=1 // pred_region
      %48 = dma.done [#allocation6], 16
    $region21: #{tpu_custom_call.1} parent=1 // pred_fallthru
      _
    // Predicated region
    $region22: #{tpu_custom_call.1} parent=1 // pred_check
      _
    $region23: #{tpu_custom_call.1} parent=1 // pred_check_branch
      %50 = sbr.rel (0) target = $region25
    $region24: #{tpu_custom_call.1} parent=1 // pred_region
      %51 = dma.done [#allocation6], 16
    $region25: #{tpu_custom_call.1} parent=1 // pred_fallthru
      _
    %v52 = vld [vmem:[#allocation2] sm:$0xff]
    %v53 = vld [vmem:[#allocation2 + $0x8] sm:$0xff]
    %vm54 = vcmask 261120
    %v55 = vsel %vm54, %v52, 0.0
    %56 = vadd.xlane.f32.xlu0 %v55
    %v57 = vpop.xlane.xlu0 %56
    %v58 = vsel %vm54, %v53, 0.0
    %59 = vadd.xlane.f32.xlu0 %v58
    %v60 = vpop.xlane.xlu0 %59
    %v61 = vrcp.pop 32.0
    %v62 = vmul.f32 %v57, %v61
    %v63 = vmul.f32 %v60, %v61
    %v64 = vsub.f32 %v52, %v62
    %v65 = vsub.f32 %v53, %v63
    %v66 = vmul.f32 %v64, %v64
    %v67 = vmul.f32 %v65, %v65
    %v68 = vsel %vm54, %v66, 0.0
    %69 = vadd.xlane.f32.xlu0 %v68
    %v70 = vpop.xlane.xlu0 %69
    %v71 = vsel %vm54, %v67, 0.0
    %72 = vadd.xlane.f32.xlu0 %v71
    %v73 = vpop.xlane.xlu0 %72
    %v74 = vmul.f32 %v70, %v61
    %v75 = vmul.f32 %v73, %v61
    %v76 = vadd.f32 %v74, 1e-05
    %v77 = vadd.f32 %v75, 1e-05
    %v78 = vrsqrt.pop %v76
    %v79 = vrsqrt.pop %v77
    %v80 = vmul.f32 %v64, %v78
    %v81 = vmul.f32 %v65, %v79
    %v82 = vld [vmem:[#allocation5] sm:$0x1]
    %v84 = vlaneseq
    %v85 = vshrl.u32 %v84, 7
    %v86 = vsub.s32 0, %v85
    %v87 = vrot.slane %v82, %v86
    %v89 = vmul.f32 %v80, %v87
    %v90 = vmul.f32 %v81, %v87
    %v91 = vld [vmem:[#allocation7] sm:$0x1]
    %v93 = vlaneseq
    %v94 = vshrl.u32 %v93, 7
    %v95 = vsub.s32 0, %v94
    %v96 = vrot.slane %v91, %v95
    %v98 = vadd.f32 %v89, %v96
    %v99 = vadd.f32 %v90, %v96
    %100 = vst.msk [vmem:[#allocation8] sm:$0xff] %vm54, %v98
    %101 = vst.msk [vmem:[#allocation8 + $0x8] sm:$0xff] %vm54, %v99
    // Predicated region
    $region26: #{tpu_custom_call.1} parent=1 // pred_check
      _
    $region27: #{tpu_custom_call.1} parent=1 // pred_check_branch
      %103 = sbr.rel (0) target = $region29
    $region28: #{tpu_custom_call.1} parent=1 // pred_region
      %s105 = ssub.s32 256, 256
      %106 = vsyncadd [#allocation4], %s105
      %s107 = sshll.u32 [#allocation8], 4
      %s108 = int_to_ptr.vmem [resolvable:$true] %s107
      %113 = dma.vmem_to_hbm [thread:$0]  %s108, 256, %s3, [#allocation4], 128, 128, 8
    $region29: #{tpu_custom_call.1} parent=1 // pred_fallthru
      _
    // Predicated region
    $region30: #{tpu_custom_call.1} parent=1 // pred_check
      _
    $region31: #{tpu_custom_call.1} parent=1 // pred_check_branch
      %115 = sbr.rel (0) target = $region33
    $region32: #{tpu_custom_call.1} parent=1 // pred_region
      %116 = dma.done [#allocation4], 256
    $region33: #{tpu_custom_call.1} parent=1 // pred_fallthru
      _
    %117 = vsyncpa [#allocation3], 1
    %118 = vsyncpa [#allocation6], 1
    %119 = vsyncpa [#allocation4], 1

</llo_original>
